<compile_context>
chip_gen: v5e
topology: v5e:2x2
jax: 0.10.0
libtpu: 0.0.40
codegen_flags: <defaults>
</compile_context>

<pallas_src>
import functools
import math

import jax
import jax.numpy as jnp
import numpy as np
from jax import lax
from jax.experimental import pallas as pl
from jax.experimental.pallas import tpu as pltpu

_LANES = 128                 # lane width of the flattened output slab
_MAX_BLOCK_ROWS = 4096       # 4096*128*4B = 2 MiB per block (fits v7x VMEM easily)


def _i32_const(x: int) -> int:
    """Python int -> equivalent int32 (two's complement) Python int."""
    x &= 0xFFFFFFFF
    return x - (1 << 32) if x >= (1 << 31) else x


def _shr_logical(x, k: int):
    """Logical right shift for int32 data: arithmetic shift + mask."""
    return (x >> k) & ((1 << (32 - k)) - 1)


def _hash_bits(counter, key):
    """Stateless counter-based 32-bit hash (lowbias32-style). int32 -> int32."""
    x = counter * _i32_const(0x9E3779B1) + key
    x = x ^ _shr_logical(x, 16)
    x = x * _i32_const(0x7FEB352D)
    x = x ^ _shr_logical(x, 15)
    x = x * _i32_const(0x846CA68B)
    x = x ^ _shr_logical(x, 16)
    return x


def _bits_to_unit(bits):
    """int32 random bits -> f32 uniform in [0, 1) via the mantissa bit-trick."""
    mant = _shr_logical(bits, 9) | 0x3F800000          # bits of a float in [1, 2)
    return lax.bitcast_convert_type(mant, jnp.float32) - 1.0


def _random_kernel(seed_ref, o_ref, *, mode: str, scale: float,
                   rows: int, lanes: int):
    pid = pl.program_id(0)
    key = seed_ref[0]                         # scalar int32 seed from SMEM
    base = pid * (rows * lanes)               # global flat counter offset of block

    if mode == "unit":
        r_ids = lax.broadcasted_iota(jnp.int32, (rows, lanes), 0)
        l_ids = lax.broadcasted_iota(jnp.int32, (rows, lanes), 1)
        counters = base + r_ids * lanes + l_ids
        out = _bits_to_unit(_hash_bits(counters, key))
    elif mode == "normal":
        # Full Box-Muller pair: one hashed draw per output element, and the
        # sqrt/log/cos/sin chain is shared by a *pair* of outputs.
        half = rows // 2                      # rows is a multiple of 8 -> even
        r_ids = lax.broadcasted_iota(jnp.int32, (half, lanes), 0)
        l_ids = lax.broadcasted_iota(jnp.int32, (half, lanes), 1)
        idx = r_ids * lanes + l_ids
        u1 = _bits_to_unit(_hash_bits(base + idx, key))
        u2 = _bits_to_unit(_hash_bits(base + half * lanes + idx, key))
        r = jnp.sqrt(-2.0 * jnp.log(1.0 - u1))          # 1-u1 in (0,1], finite log
        theta = jnp.float32(2.0 * math.pi) * u2
        out = jnp.concatenate([r * jnp.cos(theta), r * jnp.sin(theta)], axis=0)
    else:
        raise ValueError(f"unknown mode: {mode}")

    if scale != 1.0:
        out = out * jnp.float32(scale)
    o_ref[...] = out.astype(o_ref.dtype)


def pallas_random(tensor, shape, *, scale: float = 1.0, mode: str = "unit",
                  includes_batch: bool = False, seed: int = 0):
    """JAX/Pallas equivalent of Random.forward.

    `tensor` only contributes its leading (batch) dimension (exactly like the
    PyTorch module); when includes_batch=True the output shape is `shape`.
    Arbitrary shapes are supported: the output is generated as a lane-dense
    (rows, 128) slab, then sliced / reshaped to the requested shape.
    """
    if isinstance(shape, (list, tuple)):
        shape = tuple(int(s) for s in shape)
    else:
        shape = (int(shape),)

    out_dims = shape if includes_batch else (int(tensor.shape[0]),) + shape
    n = int(np.prod(out_dims))

    rows = -(-n // _LANES)                               # cdiv
    rows = max(8, ((rows + 7) // 8) * 8)                 # sublane-align
    block_rows = min(rows, _MAX_BLOCK_ROWS)              # big, VMEM-friendly block
    total_rows = ((rows + block_rows - 1) // block_rows) * block_rows
    grid = total_rows // block_rows

    seed_arr = jnp.asarray([seed], dtype=jnp.int32)
    kernel = functools.partial(_random_kernel, mode=mode, scale=float(scale),
                               rows=block_rows, lanes=_LANES)

    flat = pl.pallas_call(
        kernel,
        out_shape=jax.ShapeDtypeStruct((total_rows, _LANES), jnp.float32),
        grid=(grid,),
        in_specs=[pl.BlockSpec(memory_space=pltpu.MemorySpace.SMEM)],
        out_specs=pl.BlockSpec((block_rows, _LANES), lambda i: (i, 0)),
        compiler_params=pltpu.CompilerParams(
            dimension_semantics=("parallel",),   # counter-based PRNG -> order-free
        ),
    )(seed_arr)

    return flat.reshape(-1)[:n].reshape(out_dims)


if __name__ == "__main__":
    key = jax.random.PRNGKey(0)
    # Input tensor: only its batch dim (2) is consumed, just like the module.
    x = jax.random.normal(key, (2, 4, 16, 16), dtype=jnp.float32)

    # Random(shape=(16, 128), scale=2.0, mode='unit')
    out_unit = pallas_random(x, (16, 128), scale=2.0, mode="unit", seed=1234)
    out_unit = jax.block_until_ready(out_unit)
    assert out_unit.shape == (2, 16, 128)
    assert bool(jnp.all(out_unit >= 0.0)) and bool(jnp.all(out_unit < 2.0))

    # Random(shape=(64, 128), scale=1.0, mode='normal')
    out_normal = pallas_random(x, (64, 128), scale=1.0, mode="normal", seed=42)
    out_normal = jax.block_until_ready(out_normal)
    assert out_normal.shape == (2, 64, 128)
    assert abs(float(jnp.mean(out_normal))) < 0.1
    assert 0.85 < float(jnp.std(out_normal)) < 1.15

    # Non lane-aligned trailing shape (matches the input's own shape here).
    out_nb = pallas_random(x, (4, 16, 16), scale=1.0, mode="unit", seed=7)
    out_nb = jax.block_until_ready(out_nb)
    assert out_nb.shape == (2, 4, 16, 16)
    assert bool(jnp.all(out_nb >= 0.0)) and bool(jnp.all(out_nb < 1.0))

    # includes_batch=True: output shape is exactly `shape`.
    out_ib = pallas_random(x, (3, 8, 32), scale=0.5, mode="unit",
                           includes_batch=True, seed=9)
    out_ib = jax.block_until_ready(out_ib)
    assert out_ib.shape == (3, 8, 32)
    assert bool(jnp.all(out_ib >= 0.0)) and bool(jnp.all(out_ib < 0.5))

    print("KERNEL_OK")
</pallas_src>

<mosaic_0001>
module attributes {stable_mosaic.version = 11 : i64} {
  func.func @_random_kernel(%arg0: i32, %arg1: memref<1xi32, #tpu.memory_space<smem>>, %arg2: memref<32x128xf32, #tpu.memory_space<vmem>>) attributes {dimension_semantics = [#tpu.dimension_semantics<parallel>], iteration_bounds = array<i64: 1>, scalar_prefetch = 0 : i64, scratch_operands = 0 : i64, tpu.core_type = #tpu.core_type<tc>, window_params = [{transform_indices = @transform_0, window_bounds = array<i64: 1>}, {transform_indices = @transform_1, window_bounds = array<i64: 32, 128>}]} {
    %c0 = arith.constant 0 : index
    %0 = memref.load %arg1[%c0] : memref<1xi32, #tpu.memory_space<smem>>
    %c4096_i32 = arith.constant 4096 : i32
    %1 = arith.muli %arg0, %c4096_i32 : i32
    %2 = tpu.iota {dimensions = array<i32: 0>} : vector<32x128xi32>
    %3 = tpu.iota {dimensions = array<i32: 1>} : vector<32x128xi32>
    %c128_i32 = arith.constant 128 : i32
    %4 = vector.broadcast %c128_i32 : i32 to vector<32x128xi32>
    %5 = arith.muli %2, %4 : vector<32x128xi32>
    %6 = vector.broadcast %1 : i32 to vector<32x128xi32>
    %7 = arith.addi %6, %5 : vector<32x128xi32>
    %8 = arith.addi %7, %3 : vector<32x128xi32>
    %c-1640531535_i32 = arith.constant -1640531535 : i32
    %9 = vector.broadcast %c-1640531535_i32 : i32 to vector<32x128xi32>
    %10 = arith.muli %8, %9 : vector<32x128xi32>
    %11 = vector.broadcast %0 : i32 to vector<32x128xi32>
    %12 = arith.addi %10, %11 : vector<32x128xi32>
    %c16_i32 = arith.constant 16 : i32
    %13 = vector.broadcast %c16_i32 : i32 to vector<32x128xi32>
    %14 = arith.shrsi %12, %13 : vector<32x128xi32>
    %c65535_i32 = arith.constant 65535 : i32
    %15 = vector.broadcast %c65535_i32 : i32 to vector<32x128xi32>
    %16 = arith.andi %14, %15 : vector<32x128xi32>
    %17 = arith.xori %12, %16 : vector<32x128xi32>
    %c2146121005_i32 = arith.constant 2146121005 : i32
    %18 = vector.broadcast %c2146121005_i32 : i32 to vector<32x128xi32>
    %19 = arith.muli %17, %18 : vector<32x128xi32>
    %c15_i32 = arith.constant 15 : i32
    %20 = vector.broadcast %c15_i32 : i32 to vector<32x128xi32>
    %21 = arith.shrsi %19, %20 : vector<32x128xi32>
    %c131071_i32 = arith.constant 131071 : i32
    %22 = vector.broadcast %c131071_i32 : i32 to vector<32x128xi32>
    %23 = arith.andi %21, %22 : vector<32x128xi32>
    %24 = arith.xori %19, %23 : vector<32x128xi32>
    %c-2073254261_i32 = arith.constant -2073254261 : i32
    %25 = vector.broadcast %c-2073254261_i32 : i32 to vector<32x128xi32>
    %26 = arith.muli %24, %25 : vector<32x128xi32>
    %c16_i32_0 = arith.constant 16 : i32
    %27 = vector.broadcast %c16_i32_0 : i32 to vector<32x128xi32>
    %28 = arith.shrsi %26, %27 : vector<32x128xi32>
    %c65535_i32_1 = arith.constant 65535 : i32
    %29 = vector.broadcast %c65535_i32_1 : i32 to vector<32x128xi32>
    %30 = arith.andi %28, %29 : vector<32x128xi32>
    %31 = arith.xori %26, %30 : vector<32x128xi32>
    %c9_i32 = arith.constant 9 : i32
    %32 = vector.broadcast %c9_i32 : i32 to vector<32x128xi32>
    %33 = arith.shrsi %31, %32 : vector<32x128xi32>
    %c8388607_i32 = arith.constant 8388607 : i32
    %34 = vector.broadcast %c8388607_i32 : i32 to vector<32x128xi32>
    %35 = arith.andi %33, %34 : vector<32x128xi32>
    %c1065353216_i32 = arith.constant 1065353216 : i32
    %36 = vector.broadcast %c1065353216_i32 : i32 to vector<32x128xi32>
    %37 = arith.ori %35, %36 : vector<32x128xi32>
    %38 = tpu.bitcast %37 : vector<32x128xi32> -> vector<32x128xf32>
    %cst = arith.constant 1.000000e+00 : f32
    %39 = vector.broadcast %cst : f32 to vector<32x128xf32>
    %40 = arith.subf %38, %39 : vector<32x128xf32>
    %cst_2 = arith.constant 2.000000e+00 : f32
    %41 = vector.broadcast %cst_2 : f32 to vector<32x128xf32>
    %42 = arith.mulf %40, %41 : vector<32x128xf32>
    %c0_3 = arith.constant 0 : index
    %c0_4 = arith.constant 0 : index
    %43 = vector.load %arg2[%c0_3, %c0_4] : memref<32x128xf32, #tpu.memory_space<vmem>>, vector<32x128xf32>
    tpu.vector_store %arg2[%c0_3, %c0_4], %42 {strides = array<i32>} : memref<32x128xf32, #tpu.memory_space<vmem>>, vector<32x128xf32>,
    return
  }
  func.func @transform_0(%arg0: i32) -> i32 {
    %c0_i32 = arith.constant 0 : i32
    %c0_i32_0 = arith.constant 0 : i32
    return %c0_i32 : i32
  }
  func.func @transform_1(%arg0: i32) -> (i32, i32) {
    %c0_i32 = arith.constant 0 : i32
    %c0_i32_0 = arith.constant 0 : i32
    return %arg0, %c0_i32 : i32, i32
  }
}

</mosaic_0001>

<llo_original>
// kernel: tpu_custom_call.1
$region0: #{tpu_custom_call.1}
  #allocation0 [shape = 'u32[]', space=smem, size = 0x4, offset = 0x4, fixed_abs, tag = 'smem constant byte address 0x4 - core index']
  #allocation1 [shape = 'u32[72,128]{1,0:T(1,128)}', space=vmem, size = 0x9000, scoped, tag = 'internal scratch']
  #allocation2 [shape = 's32[1]{0:T(128)S(6)}', space=smem, size = 0x200, scoped, tag = 'scoped memory for tpu_custom_call.1']
  %s0 = inlined_call_operand.<no memory space> [shape: s32[1], index: 0, kind: input, shape index: {}]
  %s1 = inlined_call_operand.hbm [shape: f32[32,128], index: 1, kind: output, shape index: {}]
  %s2 = sld [smem:[#allocation0]]
  $region14: #{tpu_custom_call.1} parent=0
    _
  %s4 = ssub.s32 1, %s2
  %s5 = scalar_select 0, %s4, %s2
  %6 = sst [smem:[#allocation2]] %s0
  $region1: #{tpu_custom_call.1} parent=0
    #allocation3 [shape = 'u8[16384]{0}', space=vmem, size = 0x4000, scoped, tag = 'output window, operand 0, single buffered']
    #allocation4 [shape = 's32[1]{0}', space=sflag, size = 0x4, scoped, tag = 'scoped memory for tpu_custom_call.1']
    %7 = vsyncpa [#allocation4], 0
    // Predicated region
    $region2: #{tpu_custom_call.1} parent=1 // pred_check
      _
    $region3: #{tpu_custom_call.1} parent=1 // pred_check_branch
      %9 = sbr.rel (0) target = $region5
    $region4: #{tpu_custom_call.1} parent=1 // pred_region
      _
    $region5: #{tpu_custom_call.1} parent=1 // pred_fallthru
      _
    %s10 = sld [smem:[#allocation2]]
    %s11 = smul.u32 0, 4096
    %v12 = vlaneseq
    %v13 = vshrl.u32 %v12, 7
    %v14 = vadd.s32 %v13, 8
    %v15 = vadd.s32 %v13, 16
    %v16 = vadd.s32 %v13, 24
    %v17 = vlaneseq
    %v18 = vand.u32 %v17, 127
    %v19 = vmul.u32 %v13, 128
    %v20 = vmul.u32 %v14, 128
    %v21 = vmul.u32 %v15, 128
    %v22 = vmul.u32 %v16, 128
    %v23 = vstv %s11
    %v24 = vadd.s32 %v23, %v19
    %v25 = vadd.s32 %v23, %v20
    %v26 = vadd.s32 %v23, %v21
    %v27 = vadd.s32 %v23, %v22
    %v28 = vadd.s32 %v24, %v18
    %v29 = vadd.s32 %v25, %v18
    %v30 = vadd.s32 %v26, %v18
    %v31 = vadd.s32 %v27, %v18
    %v32 = vmul.u32 %v28, 2654435761
    %v33 = vmul.u32 %v29, 2654435761
    %v34 = vmul.u32 %v30, 2654435761
    %v35 = vmul.u32 %v31, 2654435761
    %v36 = vstv %s10
    %v37 = vadd.s32 %v32, %v36
    %v38 = vadd.s32 %v33, %v36
    %v39 = vadd.s32 %v34, %v36
    %v40 = vadd.s32 %v35, %v36
    %v41 = vshra.s32 %v37, 16
    %v42 = vshra.s32 %v38, 16
    %v43 = vshra.s32 %v39, 16
    %v44 = vshra.s32 %v40, 16
    %v45 = vand.u32 %v41, 65535
    %v46 = vand.u32 %v42, 65535
    %v47 = vand.u32 %v43, 65535
    %v48 = vand.u32 %v44, 65535
    %v49 = vxor.u32 %v37, %v45
    %v50 = vxor.u32 %v38, %v46
    %v51 = vxor.u32 %v39, %v47
    %v52 = vxor.u32 %v40, %v48
    %v53 = vmul.u32 %v49, 2146121005
    %v54 = vmul.u32 %v50, 2146121005
    %v55 = vmul.u32 %v51, 2146121005
    %v56 = vmul.u32 %v52, 2146121005
    %v57 = vshra.s32 %v53, 15
    %v58 = vshra.s32 %v54, 15
    %v59 = vshra.s32 %v55, 15
    %v60 = vshra.s32 %v56, 15
    %v61 = vand.u32 %v57, 131071
    %v62 = vand.u32 %v58, 131071
    %v63 = vand.u32 %v59, 131071
    %v64 = vand.u32 %v60, 131071
    %v65 = vxor.u32 %v53, %v61
    %v66 = vxor.u32 %v54, %v62
    %v67 = vxor.u32 %v55, %v63
    %v68 = vxor.u32 %v56, %v64
    %v69 = vmul.u32 %v65, 2221713035
    %v70 = vmul.u32 %v66, 2221713035
    %v71 = vmul.u32 %v67, 2221713035
    %v72 = vmul.u32 %v68, 2221713035
    %v73 = vshra.s32 %v69, 16
    %v74 = vshra.s32 %v70, 16
    %v75 = vshra.s32 %v71, 16
    %v76 = vshra.s32 %v72, 16
    %v77 = vand.u32 %v73, 65535
    %v78 = vand.u32 %v74, 65535
    %v79 = vand.u32 %v75, 65535
    %v80 = vand.u32 %v76, 65535
    %v81 = vxor.u32 %v69, %v77
    %v82 = vxor.u32 %v70, %v78
    %v83 = vxor.u32 %v71, %v79
    %v84 = vxor.u32 %v72, %v80
    %v85 = vshra.s32 %v81, 9
    %v86 = vshra.s32 %v82, 9
    %v87 = vshra.s32 %v83, 9
    %v88 = vshra.s32 %v84, 9
    %v89 = vand.u32 %v85, 8388607
    %v90 = vand.u32 %v86, 8388607
    %v91 = vand.u32 %v87, 8388607
    %v92 = vand.u32 %v88, 8388607
    %v93 = vor.u32 %v89, 1065353216
    %v94 = vor.u32 %v90, 1065353216
    %v95 = vor.u32 %v91, 1065353216
    %v96 = vor.u32 %v92, 1065353216
    %v101 = vsub.f32 %v93, 1.0
    %v102 = vsub.f32 %v94, 1.0
    %v103 = vsub.f32 %v95, 1.0
    %v104 = vsub.f32 %v96, 1.0
    %v105 = vmul.f32 %v101, 2.0
    %v106 = vmul.f32 %v102, 2.0
    %v107 = vmul.f32 %v103, 2.0
    %v108 = vmul.f32 %v104, 2.0
    %109 = vst [vmem:[#allocation3] sm:$0xff] %v105
    %110 = vst [vmem:[#allocation3 + $0x8] sm:$0xff] %v106
    %111 = vst [vmem:[#allocation3 + $0x10] sm:$0xff] %v107
    %112 = vst [vmem:[#allocation3 + $0x18] sm:$0xff] %v108
    // Predicated region
    $region6: #{tpu_custom_call.1} parent=1 // pred_check
      _
    $region7: #{tpu_custom_call.1} parent=1 // pred_check_branch
      %114 = sbr.rel (0) target = $region9
    $region8: #{tpu_custom_call.1} parent=1 // pred_region
      %116 = vsyncadd [#allocation4], 0
      %s117 = sshll.u32 [#allocation3], 4
      %s118 = int_to_ptr.vmem [resolvable:$true] %s117
      %s119 = sshll.u32 %s1, 4
      %s120 = int_to_ptr.hbm [resolvable:$true] %s119
      %125 = dma.vmem_to_hbm [thread:$0]  %s118, 512, %s120, [#allocation4], 128, 128, 8
    $region9: #{tpu_custom_call.1} parent=1 // pred_fallthru
      _
    // Predicated region
    $region10: #{tpu_custom_call.1} parent=1 // pred_check
      _
    $region11: #{tpu_custom_call.1} parent=1 // pred_check_branch
      %127 = sbr.rel (0) target = $region13
    $region12: #{tpu_custom_call.1} parent=1 // pred_region
      %129 = dma.done [#allocation4], 512
    $region13: #{tpu_custom_call.1} parent=1 // pred_fallthru
      _
    %130 = vsyncpa [#allocation4], 1

</llo_original>
